<compile_context>
chip_gen: v5e
topology: v5e:2x2
jax: 0.10.0
libtpu: 0.0.40
codegen_flags: <defaults>
</compile_context>

<pallas_src>
import jax
import jax.numpy as jnp
from jax.experimental import pallas as pl
from jax.experimental.pallas import tpu as pltpu

N = 2
# NOTE: the module declares Conv2d(3, 16, 3) but then overrides conv1.weight.data with a
# (16, 16, 3, 3) tensor, so the effective conv has 16 input channels.
C_IN = 16
C_OUT = 16
KH = KW = 3
H = W = 5                     # 5x5 input -> 3x3 conv output -> 16*3*3 = 144 = linear in-features
OH, OW = H - KH + 1, W - KW + 1
N_POS = OH * OW               # 9
FLAT = C_OUT * N_POS          # 144
K_IN = C_IN * H * W           # 400 = folded contraction depth
OUT = 2


def fused_matmul_kernel(x_ref, w_ref, o_ref):
    # x_ref: (tile_n, K_IN) flattened input batch tile
    # w_ref: (K_IN, OUT)    folded conv+linear weight (resident across the grid)
    # o_ref: (tile_n, OUT)
    o_ref[...] = jnp.dot(x_ref[...], w_ref[...],
                         preferred_element_type=jnp.float32).astype(o_ref.dtype)


def fold_weights(conv_w, lin_w):
    """Fold conv (OIHW) + PyTorch-NCHW-flatten + linear into one (C_IN*H*W, OUT) matrix.

    out[n, k] = sum_{co,oh,ow,ci,kh,kw} x[n,ci,oh+kh,ow+kw] * conv_w[co,ci,kh,kw]
                                        * lin_w[k, co*N_POS + oh*OW + ow]
    => W_full[ci*H*W + h*W + w, k] collects every (oh,ow,kh,kw) with oh+kh=h, ow+kw=w.
    Trace-time glue (9 static iterations over tiny tensors); not kernel work.
    """
    lin_r = lin_w.reshape(OUT, C_OUT, OH, OW)                     # (2, 16, 3, 3)
    w_full = jnp.zeros((C_IN, H, W, OUT), jnp.float32)
    for oh in range(OH):
        for ow in range(OW):
            # contrib[ci, kh, kw, k] = sum_co conv_w[co,ci,kh,kw] * lin_r[k,co,oh,ow]
            contrib = jnp.einsum('ocij,ko->cijk', conv_w, lin_r[:, :, oh, ow])
            w_full = w_full.at[:, oh:oh + KH, ow:ow + KW, :].add(contrib)
    return w_full.reshape(K_IN, OUT)                              # (400, 2)


def net_forward(x, conv_w, lin_w, block_n=1024):
    """x: (N, C_IN, H, W) f32; conv_w: (C_OUT, C_IN, KH, KW); lin_w: (OUT, FLAT)."""
    n = x.shape[0]
    x_flat = x.reshape(n, K_IN)                 # PyTorch NCHW flatten order: ci*H*W + h*W + w
    w_full = fold_weights(conv_w, lin_w)        # (K_IN, OUT), folded once per call

    if n <= block_n:
        # Tiny batch: single gridless block, whole problem resident in VMEM.
        vmem = pl.BlockSpec(memory_space=pltpu.MemorySpace.VMEM)
        return pl.pallas_call(
            fused_matmul_kernel,
            out_shape=jax.ShapeDtypeStruct((n, OUT), jnp.float32),
            in_specs=[vmem, vmem],
            out_specs=vmem,
        )(x_flat, w_full)

    # Large batch: tile the batch axis; "parallel" lets it shard across v7x's two
    # TensorCores.  Per step: one (block_n, 400) x (400, 2) GEMM, ~1.6 MB VMEM/tile.
    n_pad = pl.cdiv(n, block_n) * block_n
    x_p = jnp.pad(x_flat, ((0, n_pad - n), (0, 0)))
    out = pl.pallas_call(
        fused_matmul_kernel,
        out_shape=jax.ShapeDtypeStruct((n_pad, OUT), jnp.float32),
        grid=(n_pad // block_n,),
        in_specs=[pl.BlockSpec((block_n, K_IN), lambda i: (i, 0)),
                  pl.BlockSpec((K_IN, OUT), lambda i: (0, 0))],
        out_specs=pl.BlockSpec((block_n, OUT), lambda i: (i, 0)),
        compiler_params=pltpu.CompilerParams(
            dimension_semantics=("parallel",)),
    )(x_p, w_full)
    return out[:n]


if __name__ == "__main__":
    key = jax.random.PRNGKey(0)
    kx, kc, kl = jax.random.split(key, 3)

    # Deterministic parameters mirroring torch.rand(...).sub(0.5).mul(0.5): U(-0.25, 0.25)
    conv_w = (jax.random.uniform(kc, (C_OUT, C_IN, KH, KW), jnp.float32) - 0.5) * 0.5
    lin_w = (jax.random.uniform(kl, (OUT, FLAT), jnp.float32) - 0.5) * 0.5
    x = jax.random.normal(kx, (N, C_IN, H, W), jnp.float32)

    out = jax.jit(net_forward)(x, conv_w, lin_w)
    out = jax.block_until_ready(out)

    # Pure-JAX reference of the PyTorch forward: conv -> flatten -> linear
    y_ref = jax.lax.conv_general_dilated(
        x, conv_w, window_strides=(1, 1), padding="VALID",
        dimension_numbers=("NCHW", "OIHW", "NCHW"))
    ref = y_ref.reshape(N, -1) @ lin_w.T

    assert out.shape == (N, OUT)
    assert jnp.allclose(out, ref, rtol=2e-3, atol=2e-3)
    print("KERNEL_OK")
</pallas_src>

<mosaic_0001>
module attributes {stable_mosaic.version = 11 : i64} {
  func.func @fused_matmul_kernel(%arg0: memref<2x400xf32, #tpu.memory_space<vmem>>, %arg1: memref<400x2xf32, #tpu.memory_space<vmem>>, %arg2: memref<2x2xf32, #tpu.memory_space<vmem>>) attributes {dimension_semantics = [], scalar_prefetch = 0 : i64, scratch_operands = 0 : i64, tpu.core_type = #tpu.core_type<tc>} {
    %c0 = arith.constant 0 : index
    %c0_0 = arith.constant 0 : index
    %0 = vector.load %arg0[%c0, %c0_0] : memref<2x400xf32, #tpu.memory_space<vmem>>, vector<2x400xf32>
    %c0_1 = arith.constant 0 : index
    %c0_2 = arith.constant 0 : index
    %1 = vector.load %arg1[%c0_1, %c0_2] : memref<400x2xf32, #tpu.memory_space<vmem>>, vector<400x2xf32>
    %cst = arith.constant dense<0.000000e+00> : vector<2x2xf32>
    %2 = tpu.matmul %0, %1, %cst {dimension_numbers = #tpu.dot_dimension_numbers<[1], [0], [0], [1], [0, 0, 1, 1], [], []>} : vector<2x400xf32>, vector<400x2xf32>, vector<2x2xf32> -> vector<2x2xf32>
    %c0_3 = arith.constant 0 : index
    %c0_4 = arith.constant 0 : index
    %3 = vector.load %arg2[%c0_3, %c0_4] : memref<2x2xf32, #tpu.memory_space<vmem>>, vector<2x2xf32>
    tpu.vector_store %arg2[%c0_3, %c0_4], %2 {strides = array<i32>} : memref<2x2xf32, #tpu.memory_space<vmem>>, vector<2x2xf32>,
    return
  }
}

</mosaic_0001>

<llo_original>
// kernel: net_forward.1
$region0: #{net_forward.1}
  #allocation0 [shape = 'u32[]', space=smem, size = 0x4, offset = 0x4, fixed_abs, tag = 'smem constant byte address 0x4 - core index']
  #allocation1 [shape = 'u32[72,128]{1,0:T(1,128)}', space=vmem, size = 0x9000, scoped, tag = 'internal scratch']
  %s0 = inlined_call_operand.vmem [shape: f32[2,400], index: 0, kind: input, shape index: {}]
  %s1 = inlined_call_operand.vmem [shape: f32[400,2], index: 1, kind: input, shape index: {}]
  %s2 = inlined_call_operand.hbm [shape: f32[2,2], index: 2, kind: output, shape index: {}]
  %s3 = sld [smem:[#allocation0]]
  $region18: #{net_forward.1} parent=0
    _
  %s5 = ssub.s32 1, %s3
  %s6 = scalar_select 0, %s5, %s3
  $region1: #{net_forward.1} parent=0
    #allocation2 [shape = 'u8[1024]{0}', space=vmem, size = 0x400, scoped, tag = 'output window, operand 0, single buffered']
    #allocation3 [shape = 's32[1]{0}', space=sflag, size = 0x4, scoped, tag = 'scoped memory for net_forward.1']
    %7 = vsyncpa [#allocation3], 0
    // Predicated region
    $region2: #{net_forward.1} parent=1 // pred_check
      _
    $region3: #{net_forward.1} parent=1 // pred_check_branch
      %9 = sbr.rel (0) target = $region5
    $region4: #{net_forward.1} parent=1 // pred_region
      _
    $region5: #{net_forward.1} parent=1 // pred_fallthru
      _
    // Predicated region
    $region6: #{net_forward.1} parent=1 // pred_check
      _
    $region7: #{net_forward.1} parent=1 // pred_check_branch
      %11 = sbr.rel (0) target = $region9
    $region8: #{net_forward.1} parent=1 // pred_region
      _
    $region9: #{net_forward.1} parent=1 // pred_fallthru
      _
    %v12 = vld [vmem:[%s0] sm:$0xff]
    %v13 = vld [vmem:[%s1] sm:$0xff]
    %v14 = vld [vmem:[%s1 + $0x8] sm:$0xff]
    %v15 = vld [vmem:[%s1 + $0x10] sm:$0xff]
    %v16 = vld [vmem:[%s1 + $0x18] sm:$0xff]
    %v17 = vld [vmem:[%s1 + $0x20] sm:$0xff]
    %v18 = vld [vmem:[%s1 + $0x28] sm:$0xff]
    %v19 = vld [vmem:[%s1 + $0x30] sm:$0xff]
    %v20 = vld [vmem:[%s1 + $0x38] sm:$0xff]
    %v21 = vld [vmem:[%s1 + $0x40] sm:$0xff]
    %v22 = vld [vmem:[%s1 + $0x48] sm:$0xff]
    %v23 = vld [vmem:[%s1 + $0x50] sm:$0xff]
    %v24 = vld [vmem:[%s1 + $0x58] sm:$0xff]
    %v25 = vld [vmem:[%s1 + $0x60] sm:$0xff]
    %v26 = vld [vmem:[%s1 + $0x68] sm:$0xff]
    %v27 = vld [vmem:[%s1 + $0x70] sm:$0xff]
    %v28 = vld [vmem:[%s1 + $0x78] sm:$0xff]
    %v29 = vld [vmem:[%s1 + $0x80] sm:$0xff]
    %v30 = vld [vmem:[%s1 + $0x88] sm:$0xff]
    %v31 = vld [vmem:[%s1 + $0x90] sm:$0xff]
    %v32 = vld [vmem:[%s1 + $0x98] sm:$0xff]
    %v33 = vld [vmem:[%s1 + $0xa0] sm:$0xff]
    %v34 = vld [vmem:[%s1 + $0xa8] sm:$0xff]
    %v35 = vld [vmem:[%s1 + $0xb0] sm:$0xff]
    %v36 = vld [vmem:[%s1 + $0xb8] sm:$0xff]
    %v37 = vld [vmem:[%s1 + $0xc0] sm:$0xff]
    %v38 = vld [vmem:[%s1 + $0xc8] sm:$0xff]
    %v39 = vld [vmem:[%s1 + $0xd0] sm:$0xff]
    %v40 = vld [vmem:[%s1 + $0xd8] sm:$0xff]
    %v41 = vld [vmem:[%s1 + $0xe0] sm:$0xff]
    %v42 = vld [vmem:[%s1 + $0xe8] sm:$0xff]
    %v43 = vld [vmem:[%s1 + $0xf0] sm:$0xff]
    %v44 = vld [vmem:[%s1 + $0xf8] sm:$0xff]
    %v45 = vld [vmem:[%s1 + $0x100] sm:$0xff]
    %v46 = vld [vmem:[%s1 + $0x108] sm:$0xff]
    %v47 = vld [vmem:[%s1 + $0x110] sm:$0xff]
    %v48 = vld [vmem:[%s1 + $0x118] sm:$0xff]
    %v49 = vld [vmem:[%s1 + $0x120] sm:$0xff]
    %v50 = vld [vmem:[%s1 + $0x128] sm:$0xff]
    %v51 = vld [vmem:[%s1 + $0x130] sm:$0xff]
    %v52 = vld [vmem:[%s1 + $0x138] sm:$0xff]
    %v53 = vld [vmem:[%s1 + $0x140] sm:$0xff]
    %v54 = vld [vmem:[%s1 + $0x148] sm:$0xff]
    %v55 = vld [vmem:[%s1 + $0x150] sm:$0xff]
    %v56 = vld [vmem:[%s1 + $0x158] sm:$0xff]
    %v57 = vld [vmem:[%s1 + $0x160] sm:$0xff]
    %v58 = vld [vmem:[%s1 + $0x168] sm:$0xff]
    %v59 = vld [vmem:[%s1 + $0x170] sm:$0xff]
    %v60 = vld [vmem:[%s1 + $0x178] sm:$0xff]
    %v61 = vld [vmem:[%s1 + $0x180] sm:$0xff]
    %v62 = vld [vmem:[%s1 + $0x188] sm:$0xff]
    %64 = vst [vmem:[#allocation1] ss:$4 sm:$0xff] %v12
    %v65 = vld.sshfl [vmem:[#allocation1] sm:$0xff pattern:$0x73625140]
    %v66 = vld.sshfl [vmem:[#allocation1 + $0x8] sm:$0xff pattern:$0x73625140]
    %v67 = vld.sshfl [vmem:[#allocation1 + $0x10] sm:$0xff pattern:$0x73625140]
    %v68 = vld.sshfl [vmem:[#allocation1 + $0x18] sm:$0xff pattern:$0x73625140]
    %vm72 = vcmask 130048
    %v73 = vsel %vm72, %v68, 0
    %75 = vmatpush.msra.mxu0 %v28
    %76 = vmatpush.msra.mxu0 %v27
    %77 = vmatpush.msra.mxu0 %v26
    %78 = vmatpush.msra.mxu0 %v25
    %79 = vmatpush.msra.mxu0 %v24
    %80 = vmatpush.msra.mxu0 %v23
    %81 = vmatpush.msra.mxu0 %v22
    %82 = vmatpush.msra.mxu0 %v21
    %83 = vmatpush.msra.mxu0 %v20
    %84 = vmatpush.msra.mxu0 %v19
    %85 = vmatpush.msra.mxu0 %v18
    %86 = vmatpush.msra.mxu0 %v17
    %87 = vmatpush.msra.mxu0 %v16
    %88 = vmatpush.msra.mxu0 %v15
    %89 = vmatpush.msra.mxu0 %v14
    %90 = vmatpush.msra.mxu0 %v13
    %91 = vmatmul.f32.gmra.mxu0 %v65
    %v92 = vpop.f32.mrf.mxu0
    %v93 = vadd.f32 0.0, %v92
    %94 = vdwg.mxu0
    %95 = vmatpush.msra.mxu0 %v44
    %96 = vmatpush.msra.mxu0 %v43
    %97 = vmatpush.msra.mxu0 %v42
    %98 = vmatpush.msra.mxu0 %v41
    %99 = vmatpush.msra.mxu0 %v40
    %100 = vmatpush.msra.mxu0 %v39
    %101 = vmatpush.msra.mxu0 %v38
    %102 = vmatpush.msra.mxu0 %v37
    %103 = vmatpush.msra.mxu0 %v36
    %104 = vmatpush.msra.mxu0 %v35
    %105 = vmatpush.msra.mxu0 %v34
    %106 = vmatpush.msra.mxu0 %v33
    %107 = vmatpush.msra.mxu0 %v32
    %108 = vmatpush.msra.mxu0 %v31
    %109 = vmatpush.msra.mxu0 %v30
    %110 = vmatpush.msra.mxu0 %v29
    %111 = vmatmul.f32.gmra.mxu0 %v66
    %v112 = vpop.f32.mrf.mxu0
    %v113 = vadd.f32 %v93, %v112
    %114 = vdwg.mxu0
    %115 = vmatpush.msra.mxu0 %v60
    %116 = vmatpush.msra.mxu0 %v59
    %117 = vmatpush.msra.mxu0 %v58
    %118 = vmatpush.msra.mxu0 %v57
    %119 = vmatpush.msra.mxu0 %v56
    %120 = vmatpush.msra.mxu0 %v55
    %121 = vmatpush.msra.mxu0 %v54
    %122 = vmatpush.msra.mxu0 %v53
    %123 = vmatpush.msra.mxu0 %v52
    %124 = vmatpush.msra.mxu0 %v51
    %125 = vmatpush.msra.mxu0 %v50
    %126 = vmatpush.msra.mxu0 %v49
    %127 = vmatpush.msra.mxu0 %v48
    %128 = vmatpush.msra.mxu0 %v47
    %129 = vmatpush.msra.mxu0 %v46
    %130 = vmatpush.msra.mxu0 %v45
    %131 = vmatmul.f32.gmra.mxu0 %v67
    %v132 = vpop.f32.mrf.mxu0
    %v133 = vadd.f32 %v113, %v132
    %134 = vdwg.mxu0
    %135 = vmatpush.msra.mxu0 0.0
    %136 = vmatpush.msra.mxu0 0.0
    %137 = vmatpush.msra.mxu0 0.0
    %138 = vmatpush.msra.mxu0 0.0
    %139 = vmatpush.msra.mxu0 0.0
    %140 = vmatpush.msra.mxu0 0.0
    %141 = vmatpush.msra.mxu0 0.0
    %142 = vmatpush.msra.mxu0 0.0
    %143 = vmatpush.msra.mxu0 0.0
    %144 = vmatpush.msra.mxu0 0.0
    %145 = vmatpush.msra.mxu0 0.0
    %146 = vmatpush.msra.mxu0 0.0
    %147 = vmatpush.msra.mxu0 0.0
    %148 = vmatpush.msra.mxu0 0.0
    %149 = vmatpush.msra.mxu0 %v62
    %150 = vmatpush.msra.mxu0 %v61
    %151 = vmatmul.f32.gmra.mxu0 %v73
    %v152 = vpop.f32.mrf.mxu0
    %v153 = vadd.f32 %v133, %v152
    %154 = vdwg.mxu0
    %vm155 = vcmask 9216
    %156 = vst.msk [vmem:[#allocation2] sm:$0x3] %vm155, %v153
    // Predicated region
    $region10: #{net_forward.1} parent=1 // pred_check
      _
    $region11: #{net_forward.1} parent=1 // pred_check_branch
      %158 = sbr.rel (0) target = $region13
    $region12: #{net_forward.1} parent=1 // pred_region
      %160 = vsyncadd [#allocation3], 0
      %s162 = sshll.u32 [#allocation2], 4
      %s163 = int_to_ptr.vmem [resolvable:$true] %s162
      %s164 = sshll.u32 %s2, 4
      %s165 = int_to_ptr.hbm [resolvable:$true] %s164
      %167 = dma.vmem_to_hbm [thread:$0]  %s163, 32, %s165, [#allocation3]
    $region13: #{net_forward.1} parent=1 // pred_fallthru
      _
    // Predicated region
    $region14: #{net_forward.1} parent=1 // pred_check
      _
    $region15: #{net_forward.1} parent=1 // pred_check_branch
      %169 = sbr.rel (0) target = $region17
    $region16: #{net_forward.1} parent=1 // pred_region
      %171 = dma.done [#allocation3], 32
    $region17: #{net_forward.1} parent=1 // pred_fallthru
      _
    %172 = vsyncpa [#allocation3], 1

</llo_original>
